<compile_context>
chip_gen: v7x
topology: tpu7x:2x2x1
jax: 0.10.0
libtpu: 0.0.40
codegen_flags: <defaults>
</compile_context>

<pallas_src>
import jax
import jax.numpy as jnp
from jax.experimental import pallas as pl
from jax.experimental.pallas import tpu as pltpu


_LANE = 128                              # lane-dense output last dim
_MAX_TILE_ROWS = 4096                    # cap on rows per tile
_VMEM_BUDGET_BYTES = 24 * 1024 * 1024    # target for pipelining buffers
_VMEM_LIMIT_BYTES = 48 * 1024 * 1024     # scoped limit (< v7x 64 MiB physical)


def _make_wlp_kernel(num_layers):
    """Weighted sum over `num_layers` per-layer tiles, then divide by sum(w)."""
    def kernel(w_ref, *refs):
        x_refs = refs[:num_layers]
        o_ref = refs[num_layers]
        # Weighted accumulate in f32 (matches PyTorch's promotion to float32).
        acc = w_ref[0] * x_refs[0][...].astype(jnp.float32)
        for l in range(1, num_layers):
            acc = acc + w_ref[l] * x_refs[l][...].astype(jnp.float32)
        # Accumulate-then-divide: same op order as the PyTorch module.
        wsum = w_ref[0]
        for l in range(1, num_layers):
            wsum = wsum + w_ref[l]
        o_ref[...] = (acc / wsum).astype(o_ref.dtype)
    return kernel


def _choose_tile_rows(rows, num_layers, cols, in_itemsize, out_itemsize):
    # Per-row VMEM cost: double-buffered inputs (num_layers tiles per grid
    # step) + double-buffered output tile.
    bytes_per_row = 2 * (num_layers * cols * in_itemsize + cols * out_itemsize)
    tm = min(_MAX_TILE_ROWS,
             max(8, (_VMEM_BUDGET_BYTES // bytes_per_row) // 8 * 8))
    if rows <= tm:
        if rows >= 16:
            # Keep >= 2 row tiles so v7x's two TensorCores both get work.
            tm = min(rows, (((rows + 1) // 2) + 7) // 8 * 8)
        else:
            tm = rows        # full-extent block (valid layout escape hatch)
    return tm


def weighted_layer_pooling(all_hidden_states, layer_weights, layer_start):
    """all_hidden_states: (num_hidden_layers+1, B, S, H);
       layer_weights: (num_hidden_layers+1-layer_start,)."""
    L_total, B, S, H = all_hidden_states.shape
    L = L_total - layer_start
    assert layer_weights.shape == (L,)

    w = layer_weights.astype(jnp.float32)
    # PyTorch: float32 weight param * (f32/bf16/f16) hidden states -> float32.
    out_dtype = jnp.promote_types(all_hidden_states.dtype, w.dtype)

    # Reshape the FULL contiguous array (free) -- no materialized slice.
    # Lane-dense (multiple-of-128) last dim whenever possible.
    n = B * S * H
    if n % _LANE == 0:
        rows, cols = n // _LANE, _LANE
    else:
        # TODO(synk): odd hidden sizes fall back to cols=H (masked stores);
        # a padded layout would avoid the vst.msk cliff.
        rows, cols = B * S, H
    x2 = all_hidden_states.reshape(L_total, rows, cols)

    in_itemsize = jnp.dtype(x2.dtype).itemsize
    out_itemsize = jnp.dtype(out_dtype).itemsize
    tm = _choose_tile_rows(rows, L, cols, in_itemsize, out_itemsize)
    grid = (pl.cdiv(rows, tm),)

    cost = pl.CostEstimate(
        flops=2 * L * n + n,
        transcendentals=0,
        bytes_accessed=L * n * in_itemsize + n * out_itemsize + L * 4,
    )

    # One BlockSpec per selected layer, all reading row tiles of the SAME
    # input array; the layer offset lives in the index_map (no slice copy).
    x_specs = [
        pl.BlockSpec((pl.Squeezed(), tm, cols),
                     (lambda i, _l=layer_start + li: (_l, i, 0)))
        for li in range(L)
    ]

    out = pl.pallas_call(
        _make_wlp_kernel(L),
        out_shape=jax.ShapeDtypeStruct((rows, cols), out_dtype),
        grid_spec=pltpu.PrefetchScalarGridSpec(
            num_scalar_prefetch=0,
            grid=grid,
            in_specs=[pl.BlockSpec(memory_space=pltpu.SMEM)] + x_specs,
            out_specs=pl.BlockSpec((tm, cols), lambda i: (i, 0)),
        ),
        compiler_params=pltpu.CompilerParams(
            # Row tiles are independent -> parallel (v7x 2-TC sharding).
            dimension_semantics=("parallel",),
            vmem_limit_bytes=_VMEM_LIMIT_BYTES,
        ),
        cost_estimate=cost,
    )(w, *([x2] * L))

    return out.reshape(B, S, H)


if __name__ == "__main__":
    # Module config (mirrors WeightedLayerPooling.__init__ defaults):
    num_hidden_layers = 12
    layer_start = 8
    L_sel = num_hidden_layers + 1 - layer_start  # = 5

    # nn.Parameter(torch.tensor([1]*L_sel, dtype=torch.float)) equivalent.
    layer_weights = jnp.ones((L_sel,), dtype=jnp.float32)

    # Small example input: (num_hidden_layers+1, batch, seq, hidden)
    key = jax.random.PRNGKey(0)
    B, S, H = 2, 8, 32
    all_hidden_states = jax.random.normal(
        key, (num_hidden_layers + 1, B, S, H), dtype=jnp.float32
    )

    out = weighted_layer_pooling(all_hidden_states, layer_weights, layer_start)
    out = jax.block_until_ready(out)

    # Reference (plain JAX) check of forward semantics.
    x_sel = all_hidden_states[layer_start:]
    wf = layer_weights[:, None, None, None]
    ref = (wf * x_sel).sum(axis=0) / layer_weights.sum()
    assert out.shape == (B, S, H)
    assert out.dtype == ref.dtype
    assert jnp.allclose(out, ref, atol=1e-5, rtol=1e-5)

    print("KERNEL_OK")
</pallas_src>

<mosaic_0001>
module attributes {stable_mosaic.version = 11 : i64} {
  func.func @kernel(%arg0: i32, %arg1: memref<5xf32, #tpu.memory_space<smem>>, %arg2: memref<1x4x128xf32, #tpu.memory_space<vmem>>, %arg3: memref<1x4x128xf32, #tpu.memory_space<vmem>>, %arg4: memref<1x4x128xf32, #tpu.memory_space<vmem>>, %arg5: memref<1x4x128xf32, #tpu.memory_space<vmem>>, %arg6: memref<1x4x128xf32, #tpu.memory_space<vmem>>, %arg7: memref<4x128xf32, #tpu.memory_space<vmem>>) attributes {dimension_semantics = [#tpu.dimension_semantics<parallel>], iteration_bounds = array<i64: 1>, scalar_prefetch = 0 : i64, scratch_operands = 0 : i64, tpu.core_type = #tpu.core_type<tc>, window_params = [{transform_indices = @transform_0, window_bounds = array<i64: 5>}, {transform_indices = @transform_1, window_bounds = array<i64: 1, 4, 128>}, {transform_indices = @transform_2, window_bounds = array<i64: 1, 4, 128>}, {transform_indices = @transform_3, window_bounds = array<i64: 1, 4, 128>}, {transform_indices = @transform_4, window_bounds = array<i64: 1, 4, 128>}, {transform_indices = @transform_5, window_bounds = array<i64: 1, 4, 128>}, {transform_indices = @transform_6, window_bounds = array<i64: 4, 128>}]} {
    %c0 = arith.constant 0 : index
    %0 = memref.load %arg1[%c0] : memref<5xf32, #tpu.memory_space<smem>>
    %c0_0 = arith.constant 0 : index
    %c0_1 = arith.constant 0 : index
    %c0_2 = arith.constant 0 : index
    %1 = vector.load %arg2[%c0_0, %c0_1, %c0_2] : memref<1x4x128xf32, #tpu.memory_space<vmem>>, vector<1x4x128xf32>
    %2 = vector.shape_cast %1 : vector<1x4x128xf32> to vector<4x128xf32>
    %3 = vector.broadcast %0 : f32 to vector<4x128xf32>
    %4 = arith.mulf %3, %2 : vector<4x128xf32>
    %c1 = arith.constant 1 : index
    %5 = memref.load %arg1[%c1] : memref<5xf32, #tpu.memory_space<smem>>
    %c0_3 = arith.constant 0 : index
    %c0_4 = arith.constant 0 : index
    %c0_5 = arith.constant 0 : index
    %6 = vector.load %arg3[%c0_3, %c0_4, %c0_5] : memref<1x4x128xf32, #tpu.memory_space<vmem>>, vector<1x4x128xf32>
    %7 = vector.shape_cast %6 : vector<1x4x128xf32> to vector<4x128xf32>
    %8 = vector.broadcast %5 : f32 to vector<4x128xf32>
    %9 = arith.mulf %8, %7 : vector<4x128xf32>
    %10 = arith.addf %4, %9 : vector<4x128xf32>
    %c2 = arith.constant 2 : index
    %11 = memref.load %arg1[%c2] : memref<5xf32, #tpu.memory_space<smem>>
    %c0_6 = arith.constant 0 : index
    %c0_7 = arith.constant 0 : index
    %c0_8 = arith.constant 0 : index
    %12 = vector.load %arg4[%c0_6, %c0_7, %c0_8] : memref<1x4x128xf32, #tpu.memory_space<vmem>>, vector<1x4x128xf32>
    %13 = vector.shape_cast %12 : vector<1x4x128xf32> to vector<4x128xf32>
    %14 = vector.broadcast %11 : f32 to vector<4x128xf32>
    %15 = arith.mulf %14, %13 : vector<4x128xf32>
    %16 = arith.addf %10, %15 : vector<4x128xf32>
    %c3 = arith.constant 3 : index
    %17 = memref.load %arg1[%c3] : memref<5xf32, #tpu.memory_space<smem>>
    %c0_9 = arith.constant 0 : index
    %c0_10 = arith.constant 0 : index
    %c0_11 = arith.constant 0 : index
    %18 = vector.load %arg5[%c0_9, %c0_10, %c0_11] : memref<1x4x128xf32, #tpu.memory_space<vmem>>, vector<1x4x128xf32>
    %19 = vector.shape_cast %18 : vector<1x4x128xf32> to vector<4x128xf32>
    %20 = vector.broadcast %17 : f32 to vector<4x128xf32>
    %21 = arith.mulf %20, %19 : vector<4x128xf32>
    %22 = arith.addf %16, %21 : vector<4x128xf32>
    %c4 = arith.constant 4 : index
    %23 = memref.load %arg1[%c4] : memref<5xf32, #tpu.memory_space<smem>>
    %c0_12 = arith.constant 0 : index
    %c0_13 = arith.constant 0 : index
    %c0_14 = arith.constant 0 : index
    %24 = vector.load %arg6[%c0_12, %c0_13, %c0_14] : memref<1x4x128xf32, #tpu.memory_space<vmem>>, vector<1x4x128xf32>
    %25 = vector.shape_cast %24 : vector<1x4x128xf32> to vector<4x128xf32>
    %26 = vector.broadcast %23 : f32 to vector<4x128xf32>
    %27 = arith.mulf %26, %25 : vector<4x128xf32>
    %28 = arith.addf %22, %27 : vector<4x128xf32>
    %c0_15 = arith.constant 0 : index
    %29 = memref.load %arg1[%c0_15] : memref<5xf32, #tpu.memory_space<smem>>
    %c1_16 = arith.constant 1 : index
    %30 = memref.load %arg1[%c1_16] : memref<5xf32, #tpu.memory_space<smem>>
    %31 = arith.addf %29, %30 : f32
    %c2_17 = arith.constant 2 : index
    %32 = memref.load %arg1[%c2_17] : memref<5xf32, #tpu.memory_space<smem>>
    %33 = arith.addf %31, %32 : f32
    %c3_18 = arith.constant 3 : index
    %34 = memref.load %arg1[%c3_18] : memref<5xf32, #tpu.memory_space<smem>>
    %35 = arith.addf %33, %34 : f32
    %c4_19 = arith.constant 4 : index
    %36 = memref.load %arg1[%c4_19] : memref<5xf32, #tpu.memory_space<smem>>
    %37 = arith.addf %35, %36 : f32
    %38 = vector.broadcast %37 : f32 to vector<4x128xf32>
    %39 = arith.divf %28, %38 : vector<4x128xf32>
    %c0_20 = arith.constant 0 : index
    %c0_21 = arith.constant 0 : index
    %40 = vector.load %arg7[%c0_20, %c0_21] : memref<4x128xf32, #tpu.memory_space<vmem>>, vector<4x128xf32>
    tpu.vector_store %arg7[%c0_20, %c0_21], %39 {strides = array<i32>} : memref<4x128xf32, #tpu.memory_space<vmem>>, vector<4x128xf32>,
    return
  }
  func.func @transform_0(%arg0: i32) -> i32 {
    %c0_i32 = arith.constant 0 : i32
    %c0_i32_0 = arith.constant 0 : i32
    return %c0_i32 : i32
  }
  func.func @transform_1(%arg0: i32) -> (i32, i32, i32) {
    %c8_i32 = arith.constant 8 : i32
    %c0_i32 = arith.constant 0 : i32
    %c0_i32_0 = arith.constant 0 : i32
    return %c8_i32, %arg0, %c0_i32 : i32, i32, i32
  }
  func.func @transform_2(%arg0: i32) -> (i32, i32, i32) {
    %c9_i32 = arith.constant 9 : i32
    %c0_i32 = arith.constant 0 : i32
    %c0_i32_0 = arith.constant 0 : i32
    return %c9_i32, %arg0, %c0_i32 : i32, i32, i32
  }
  func.func @transform_3(%arg0: i32) -> (i32, i32, i32) {
    %c10_i32 = arith.constant 10 : i32
    %c0_i32 = arith.constant 0 : i32
    %c0_i32_0 = arith.constant 0 : i32
    return %c10_i32, %arg0, %c0_i32 : i32, i32, i32
  }
  func.func @transform_4(%arg0: i32) -> (i32, i32, i32) {
    %c11_i32 = arith.constant 11 : i32
    %c0_i32 = arith.constant 0 : i32
    %c0_i32_0 = arith.constant 0 : i32
    return %c11_i32, %arg0, %c0_i32 : i32, i32, i32
  }
  func.func @transform_5(%arg0: i32) -> (i32, i32, i32) {
    %c12_i32 = arith.constant 12 : i32
    %c0_i32 = arith.constant 0 : i32
    %c0_i32_0 = arith.constant 0 : i32
    return %c12_i32, %arg0, %c0_i32 : i32, i32, i32
  }
  func.func @transform_6(%arg0: i32) -> (i32, i32) {
    %c0_i32 = arith.constant 0 : i32
    %c0_i32_0 = arith.constant 0 : i32
    return %arg0, %c0_i32 : i32, i32
  }
}

</mosaic_0001>

<llo_original>
// kernel: tpu_custom_call.1
$region0: #{tpu_custom_call.1}
  #allocation0 [shape = 'u32[]', space=smem, size = 0x4, offset = 0x4, fixed_abs, tag = 'smem constant byte address 0x4 - core index']
  #allocation1 [shape = 'u32[144,128]{1,0:T(1,128)}', space=vmem, size = 0x12000, scoped, tag = 'internal scratch']
  %s0 = inlined_call_operand.hbm [shape: f32[5], index: 0, kind: input, shape index: {}]
  %s1 = inlined_call_operand.hbm [shape: f32[13,4,128], index: 1, kind: input, shape index: {}]
  %s2 = inlined_call_operand.hbm [shape: f32[13,4,128], index: 2, kind: input, shape index: {}]
  %s3 = inlined_call_operand.hbm [shape: f32[13,4,128], index: 3, kind: input, shape index: {}]
  %s4 = inlined_call_operand.hbm [shape: f32[13,4,128], index: 4, kind: input, shape index: {}]
  %s5 = inlined_call_operand.hbm [shape: f32[13,4,128], index: 5, kind: input, shape index: {}]
  %s6 = inlined_call_operand.hbm [shape: f32[4,128], index: 6, kind: output, shape index: {}]
  %s7 = sld [smem:[#allocation0]]
  $region58: #{tpu_custom_call.1} parent=0
    _
  %s9 = ssub.s32 1, %s7
  %s10 = scalar_select 0, %s9, %s7
  $region1: #{tpu_custom_call.1} parent=0
    #allocation2 [shape = 'u8[512]{0}', space=smem, size = 0x200, scoped, tag = 'input window, operand 0, single buffered']
    #allocation3 [shape = 's32[1]{0}', space=sflag, size = 0x4, scoped, tag = 'scoped memory for tpu_custom_call.1']
    #allocation4 [shape = 's32[1]{0}', space=sflag, size = 0x4, scoped, tag = 'scoped memory for tpu_custom_call.1']
    #allocation5 [shape = 's32[1]{0}', space=sflag, size = 0x4, scoped, tag = 'scoped memory for tpu_custom_call.1']
    #allocation6 [shape = 'u8[2048]{0}', space=vmem, size = 0x800, scoped, tag = 'input window, operand 1, single buffered']
    #allocation7 [shape = 'u8[2048]{0}', space=vmem, size = 0x800, scoped, tag = 'input window, operand 2, single buffered']
    #allocation8 [shape = 's32[1]{0}', space=sflag, size = 0x4, scoped, tag = 'scoped memory for tpu_custom_call.1']
    #allocation9 [shape = 'u8[2048]{0}', space=vmem, size = 0x800, scoped, tag = 'input window, operand 3, single buffered']
    #allocation10 [shape = 'u8[2048]{0}', space=vmem, size = 0x800, scoped, tag = 'input window, operand 4, single buffered']
    #allocation11 [shape = 's32[1]{0}', space=sflag, size = 0x4, scoped, tag = 'scoped memory for tpu_custom_call.1']
    #allocation12 [shape = 'u8[2048]{0}', space=vmem, size = 0x800, scoped, tag = 'input window, operand 5, single buffered']
    #allocation13 [shape = 'u8[2048]{0}', space=vmem, size = 0x800, scoped, tag = 'output window, operand 0, single buffered']
    %11 = vsyncpa [#allocation5], 0
    %12 = vsyncpa [#allocation3], 0
    %13 = vsyncpa [#allocation8], 0
    %14 = vsyncpa [#allocation11], 0
    %15 = vsyncpa [#allocation4], 0
    // Predicated region
    $region2: #{tpu_custom_call.1} parent=1 // pred_check
      _
    $region3: #{tpu_custom_call.1} parent=1 // pred_check_branch
      %17 = sbr.rel (0) target = $region5
    $region4: #{tpu_custom_call.1} parent=1 // pred_region
      %s19 = ssub.s32 16, 16
      %20 = vsyncadd [#allocation5], %s19
      %23 = dma.hbm_to_smem %s0, 16, [#allocation2], [#allocation5]
    $region5: #{tpu_custom_call.1} parent=1 // pred_fallthru
      _
    // Predicated region
    $region6: #{tpu_custom_call.1} parent=1 // pred_check
      _
    $region7: #{tpu_custom_call.1} parent=1 // pred_check_branch
      %25 = sbr.rel (0) target = $region9
    $region8: #{tpu_custom_call.1} parent=1 // pred_region
      %s27 = ssub.s32 64, 64
      %28 = vsyncadd [#allocation3], %s27
      %s29 = scalar_lea.hbm %s1, 512
      %s31 = sshll.u32 [#allocation6], 4
      %s32 = int_to_ptr.vmem [resolvable:$true] %s31
      %34 = dma.hbm_to_vmem [thread:$0]  %s29, 64, %s32, [#allocation3]
    $region9: #{tpu_custom_call.1} parent=1 // pred_fallthru
      _
    // Predicated region
    $region10: #{tpu_custom_call.1} parent=1 // pred_check
      _
    $region11: #{tpu_custom_call.1} parent=1 // pred_check_branch
      %36 = sbr.rel (0) target = $region13
    $region12: #{tpu_custom_call.1} parent=1 // pred_region
      %s38 = ssub.s32 64, 64
      %39 = vsyncadd [#allocation8], %s38
      %s40 = scalar_lea.hbm %s2, 576
      %s42 = sshll.u32 [#allocation7], 4
      %s43 = int_to_ptr.vmem [resolvable:$true] %s42
      %45 = dma.hbm_to_vmem [thread:$0]  %s40, 64, %s43, [#allocation8]
    $region13: #{tpu_custom_call.1} parent=1 // pred_fallthru
      _
    // Predicated region
    $region14: #{tpu_custom_call.1} parent=1 // pred_check
      _
    $region15: #{tpu_custom_call.1} parent=1 // pred_check_branch
      %47 = sbr.rel (0) target = $region17
    $region16: #{tpu_custom_call.1} parent=1 // pred_region
      %s49 = ssub.s32 64, 64
      %50 = vsyncadd [#allocation8], %s49
      %s51 = scalar_lea.hbm %s3, 640
      %s53 = sshll.u32 [#allocation9], 4
      %s54 = int_to_ptr.vmem [resolvable:$true] %s53
      %56 = dma.hbm_to_vmem [thread:$0]  %s51, 64, %s54, [#allocation8]
    $region17: #{tpu_custom_call.1} parent=1 // pred_fallthru
      _
    // Predicated region
    $region18: #{tpu_custom_call.1} parent=1 // pred_check
      _
    $region19: #{tpu_custom_call.1} parent=1 // pred_check_branch
      %58 = sbr.rel (0) target = $region21
    $region20: #{tpu_custom_call.1} parent=1 // pred_region
      %s60 = ssub.s32 64, 64
      %61 = vsyncadd [#allocation11], %s60
      %s62 = scalar_lea.hbm %s4, 704
      %s64 = sshll.u32 [#allocation10], 4
      %s65 = int_to_ptr.vmem [resolvable:$true] %s64
      %67 = dma.hbm_to_vmem [thread:$0]  %s62, 64, %s65, [#allocation11]
    $region21: #{tpu_custom_call.1} parent=1 // pred_fallthru
      _
    // Predicated region
    $region22: #{tpu_custom_call.1} parent=1 // pred_check
      _
    $region23: #{tpu_custom_call.1} parent=1 // pred_check_branch
      %69 = sbr.rel (0) target = $region25
    $region24: #{tpu_custom_call.1} parent=1 // pred_region
      %s71 = ssub.s32 64, 64
      %72 = vsyncadd [#allocation11], %s71
      %s73 = scalar_lea.hbm %s5, 768
      %s75 = sshll.u32 [#allocation12], 4
      %s76 = int_to_ptr.vmem [resolvable:$true] %s75
      %78 = dma.hbm_to_vmem [thread:$0]  %s73, 64, %s76, [#allocation11]
    $region25: #{tpu_custom_call.1} parent=1 // pred_fallthru
      _
    // Predicated region
    $region26: #{tpu_custom_call.1} parent=1 // pred_check
      _
    $region27: #{tpu_custom_call.1} parent=1 // pred_check_branch
      %80 = sbr.rel (0) target = $region29
    $region28: #{tpu_custom_call.1} parent=1 // pred_region
      %81 = dma.done [#allocation5], 16
    $region29: #{tpu_custom_call.1} parent=1 // pred_fallthru
      _
    // Predicated region
    $region30: #{tpu_custom_call.1} parent=1 // pred_check
      _
    $region31: #{tpu_custom_call.1} parent=1 // pred_check_branch
      %83 = sbr.rel (0) target = $region33
    $region32: #{tpu_custom_call.1} parent=1 // pred_region
      %84 = dma.done [#allocation3], 64
    $region33: #{tpu_custom_call.1} parent=1 // pred_fallthru
      _
    // Predicated region
    $region34: #{tpu_custom_call.1} parent=1 // pred_check
      _
    $region35: #{tpu_custom_call.1} parent=1 // pred_check_branch
      %86 = sbr.rel (0) target = $region37
    $region36: #{tpu_custom_call.1} parent=1 // pred_region
      %87 = dma.done [#allocation8], 64
    $region37: #{tpu_custom_call.1} parent=1 // pred_fallthru
      _
    // Predicated region
    $region38: #{tpu_custom_call.1} parent=1 // pred_check
      _
    $region39: #{tpu_custom_call.1} parent=1 // pred_check_branch
      %89 = sbr.rel (0) target = $region41
    $region40: #{tpu_custom_call.1} parent=1 // pred_region
      %90 = dma.done [#allocation8], 64
    $region41: #{tpu_custom_call.1} parent=1 // pred_fallthru
      _
    // Predicated region
    $region42: #{tpu_custom_call.1} parent=1 // pred_check
      _
    $region43: #{tpu_custom_call.1} parent=1 // pred_check_branch
      %92 = sbr.rel (0) target = $region45
    $region44: #{tpu_custom_call.1} parent=1 // pred_region
      %93 = dma.done [#allocation11], 64
    $region45: #{tpu_custom_call.1} parent=1 // pred_fallthru
      _
    // Predicated region
    $region46: #{tpu_custom_call.1} parent=1 // pred_check
      _
    $region47: #{tpu_custom_call.1} parent=1 // pred_check_branch
      %95 = sbr.rel (0) target = $region49
    $region48: #{tpu_custom_call.1} parent=1 // pred_region
      %96 = dma.done [#allocation11], 64
    $region49: #{tpu_custom_call.1} parent=1 // pred_fallthru
      _
    %97 = sfence
    %s98 = sld [smem:[#allocation2]]
    %v99 = vld [vmem:[#allocation6] sm:$0xf]
    %v100 = vstv %s98
    %v101 = vmul.f32 %v100, %v99
    %s102 = sld [smem:[#allocation2 + $0x1]]
    %v103 = vld [vmem:[#allocation7] sm:$0xf]
    %v104 = vstv %s102
    %v105 = vmul.f32 %v104, %v103
    %v106 = vadd.f32 %v101, %v105
    %s107 = sld [smem:[#allocation2 + $0x2]]
    %v108 = vld [vmem:[#allocation9] sm:$0xf]
    %v109 = vstv %s107
    %v110 = vmul.f32 %v109, %v108
    %v111 = vadd.f32 %v106, %v110
    %s112 = sld [smem:[#allocation2 + $0x3]]
    %v113 = vld [vmem:[#allocation10] sm:$0xf]
    %v114 = vstv %s112
    %v115 = vmul.f32 %v114, %v113
    %v116 = vadd.f32 %v111, %v115
    %s117 = sld [smem:[#allocation2 + $0x4]]
    %v118 = vld [vmem:[#allocation12] sm:$0xf]
    %v119 = vstv %s117
    %v120 = vmul.f32 %v119, %v118
    %v121 = vadd.f32 %v116, %v120
    %s122 = sadd.f32 %s98, %s102
    %s123 = sadd.f32 %s122, %s107
    %s124 = sadd.f32 %s123, %s112
    %s125 = sadd.f32 %s124, %s117
    %v126 = vstv %s125
    %v127 = vrcp.pop %v126
    %v128 = vmul.f32 %v121, %v127
    %129 = vst [vmem:[#allocation13] sm:$0xf] %v128
    // Predicated region
    $region50: #{tpu_custom_call.1} parent=1 // pred_check
      _
    $region51: #{tpu_custom_call.1} parent=1 // pred_check_branch
      %131 = sbr.rel (0) target = $region53
    $region52: #{tpu_custom_call.1} parent=1 // pred_region
      %s133 = ssub.s32 64, 64
      %134 = vsyncadd [#allocation4], %s133
      %s136 = sshll.u32 [#allocation13], 4
      %s137 = int_to_ptr.vmem [resolvable:$true] %s136
      %139 = dma.vmem_to_hbm [thread:$0]  %s137, 64, %s6, [#allocation4]
    $region53: #{tpu_custom_call.1} parent=1 // pred_fallthru
      _
    // Predicated region
    $region54: #{tpu_custom_call.1} parent=1 // pred_check
      _
    $region55: #{tpu_custom_call.1} parent=1 // pred_check_branch
      %141 = sbr.rel (0) target = $region57
    $region56: #{tpu_custom_call.1} parent=1 // pred_region
      %142 = dma.done [#allocation4], 64
    $region57: #{tpu_custom_call.1} parent=1 // pred_fallthru
      _
    %143 = vsyncpa [#allocation3], 1
    %144 = vsyncpa [#allocation8], 1
    %145 = vsyncpa [#allocation11], 1
    %146 = vsyncpa [#allocation4], 1
    %147 = vsyncpa [#allocation5], 1

</llo_original>
